<compile_context>
chip_gen: v7x
topology: tpu7x:2x2x1
jax: 0.10.0
libtpu: 0.0.40
codegen_flags: <defaults>
</compile_context>

<pallas_src>
import functools

import jax
import jax.numpy as jnp
from jax.experimental import pallas as pl
from jax.experimental.pallas import tpu as pltpu


def _vmem_capacity_bytes():
    """Best-effort per-core VMEM capacity; conservative fallback (v7x = 64 MiB)."""
    try:
        info = pltpu.get_tpu_info()
        cap = getattr(info, "vmem_capacity_bytes", None)
        if cap:
            return int(cap)
    except Exception:
        pass
    return 64 * 2**20


_VMEM_CAP = _vmem_capacity_bytes()


def _sublane_align(*dtypes):
    """Second-minor block alignment required by the packed (8/16/32, 128) tiles."""
    a = 8
    for dt in dtypes:
        a = max(a, 32 // jnp.dtype(dt).itemsize)
    return a


def _images_per_block(batch, n_tok_pad, target_rows, min_grid_steps):
    """Images per M-tile: TM = ipb * n_tok_pad ~ target_rows, grid >= min steps."""
    ipb = max(1, target_rows // n_tok_pad)
    ipb = min(ipb, batch)
    if min_grid_steps > 1 and batch >= min_grid_steps:
        ipb = min(ipb, max(1, batch // min_grid_steps))
    return ipb


def _patch_embed_kernel(x_ref, w_ref, add_ref, o_ref):
    # x_ref:   (TM, K)         token rows (zero rows for cls slot / padding)
    # w_ref:   (K, E)          projection weight, resident across grid steps
    # add_ref: (n_tok_pad, E)  f32 additive term: cls+pos[0] / bias+pos[t] / 0 (pad)
    # o_ref:   (TM, E)         single full, aligned, lane-dense store
    acc = jnp.dot(x_ref[...], w_ref[...], preferred_element_type=jnp.float32)
    n_tok_pad, e = add_ref.shape
    ipb = acc.shape[0] // n_tok_pad
    # Leading-dim-only reshape (n_tok_pad is a multiple of 8) -> layout preserving.
    acc = acc.reshape(ipb, n_tok_pad, e) + add_ref[...]
    o_ref[...] = acc.reshape(o_ref.shape).astype(o_ref.dtype)


@functools.partial(
    jax.jit,
    static_argnames=("patch_size", "compute_dtype", "out_dtype",
                     "target_rows", "min_grid_steps"))
def patch_embedding(x, conv_w, conv_b, cls_token, pos_emb, *, patch_size,
                    compute_dtype=jnp.bfloat16, out_dtype=jnp.float32,
                    target_rows=512, min_grid_steps=2):
    """x: (B, C, H, W) NCHW. Returns (B, N+1, E) in out_dtype."""
    B, C, H, W = x.shape
    p = patch_size
    E = conv_w.shape[0]
    Hp, Wp = H // p, W // p
    N = Hp * Wp
    K = C * p * p
    n_tok = N + 1

    align = _sublane_align(compute_dtype, out_dtype)
    n_tok_pad = -(-n_tok // align) * align
    pad_rows = n_tok_pad - n_tok

    # --- host glue (reshape/transpose only, fused under jit) ---
    # (B,C,H,W) -> (B,Hp,Wp,C,p,p) -> (B,N,K); feature order (c,u,v) matches the
    # Conv2d weight layout (E, C, p, p).
    xp = x.reshape(B, C, Hp, p, Wp, p).transpose(0, 2, 4, 1, 3, 5).reshape(B, N, K)
    rows = [jnp.zeros((B, 1, K), xp.dtype), xp]              # zero row = cls slot
    if pad_rows:
        rows.append(jnp.zeros((B, pad_rows, K), xp.dtype))   # sublane padding rows
    tokens = jnp.concatenate(rows, axis=1)                    # (B, n_tok_pad, K)

    # Fold bias, cls token and positional embedding into one f32 additive term.
    add_rows = [cls_token.reshape(1, E) + pos_emb[0:1, :],
                conv_b.reshape(1, E) + pos_emb[1:, :]]
    if pad_rows:
        add_rows.append(jnp.zeros((pad_rows, E), pos_emb.dtype))
    add_tok = jnp.concatenate(add_rows, axis=0).astype(jnp.float32)  # (n_tok_pad, E)

    # Conv weight (E, C, p, p) -> (K, E) so token @ W == conv output.
    w = conv_w.reshape(E, K).T

    # --- M tiling ---
    ipb = _images_per_block(B, n_tok_pad, target_rows, min_grid_steps)
    B_pad = -(-B // ipb) * ipb
    if B_pad != B:
        tokens = jnp.concatenate(
            [tokens, jnp.zeros((B_pad - B, n_tok_pad, K), tokens.dtype)], axis=0)
    M = B_pad * n_tok_pad
    TM = ipb * n_tok_pad          # multiple of `align` by construction
    grid = (M // TM,)

    tokens = tokens.reshape(M, K).astype(compute_dtype)
    w = w.astype(compute_dtype)

    in_b = jnp.dtype(compute_dtype).itemsize
    out_b = jnp.dtype(out_dtype).itemsize
    # Working set: double-buffered token/out blocks + (double-buffered) residents
    # + f32 accumulate/epilogue temps + headroom.
    need = (2 * TM * K * in_b + 2 * TM * E * out_b + 2 * K * E * in_b
            + 2 * n_tok_pad * E * 4 + 2 * TM * E * 4 + (2 << 20))
    cap = max(32 * 2**20, (_VMEM_CAP * 3) // 4)
    vmem_limit = int(min(cap, max(need, 16 * 2**20)))

    cost = pl.CostEstimate(
        flops=2 * M * K * E,
        transcendentals=0,
        bytes_accessed=(M * K * in_b + K * E * in_b + n_tok_pad * E * 4
                        + M * E * out_b),
    )

    out = pl.pallas_call(
        _patch_embed_kernel,
        out_shape=jax.ShapeDtypeStruct((M, E), out_dtype),
        grid_spec=pltpu.PrefetchScalarGridSpec(
            num_scalar_prefetch=0,
            grid=grid,
            in_specs=[
                pl.BlockSpec((TM, K), lambda i: (i, 0)),          # streamed tokens
                pl.BlockSpec((K, E), lambda i: (0, 0)),           # resident weight
                pl.BlockSpec((n_tok_pad, E), lambda i: (0, 0)),   # resident add term
            ],
            out_specs=pl.BlockSpec((TM, E), lambda i: (i, 0)),
        ),
        compiler_params=pltpu.CompilerParams(
            dimension_semantics=("parallel",),
            vmem_limit_bytes=vmem_limit),
        cost_estimate=cost,
    )(tokens, w, add_tok)

    return out.reshape(B_pad, n_tok_pad, E)[:B, :n_tok]


def _reference(x, conv_w, conv_b, cls_token, pos_emb, patch_size):
    """Pure-JAX reference mirroring the PyTorch forward."""
    B = x.shape[0]
    E = conv_w.shape[0]
    y = jax.lax.conv_general_dilated(
        x, conv_w,
        window_strides=(patch_size, patch_size),
        padding="VALID",
        dimension_numbers=("NCHW", "OIHW", "NCHW"),
    ) + conv_b.reshape(1, E, 1, 1)                       # (B, E, H/p, W/p)
    Bc, Ec, h, w = y.shape
    y = y.reshape(Bc, Ec, h * w).transpose(0, 2, 1)      # b e h w -> b (h w) e
    cls = jnp.broadcast_to(cls_token, (B, 1, E))
    out = jnp.concatenate([cls, y], axis=1)
    return out + pos_emb[None, :, :]


if __name__ == "__main__":
    # Small shapes consistent with the module: in_channels=4, patch_size=4,
    # emb_size=32, img_size=16 -> 16 patches, 17 tokens.
    B, C, IMG, P, E = 2, 4, 16, 4, 32
    N = (IMG // P) ** 2

    key = jax.random.PRNGKey(0)
    kx, kw, kb, kc, kp = jax.random.split(key, 5)
    x = jax.random.normal(kx, (B, C, IMG, IMG), dtype=jnp.float32)
    conv_w = jax.random.normal(kw, (E, C, P, P), dtype=jnp.float32) * 0.05
    conv_b = jax.random.normal(kb, (E,), dtype=jnp.float32) * 0.05
    cls_token = jax.random.normal(kc, (1, 1, E), dtype=jnp.float32)
    pos_emb = jax.random.normal(kp, (N + 1, E), dtype=jnp.float32)

    ref = _reference(x, conv_w, conv_b, cls_token, pos_emb, P)

    # Exact check: f32 compute / f32 out (multi-step grid: B=2, ipb=1).
    out_f32 = jax.block_until_ready(
        patch_embedding(x, conv_w, conv_b, cls_token, pos_emb, patch_size=P,
                        compute_dtype=jnp.float32, out_dtype=jnp.float32))
    assert out_f32.shape == (B, N + 1, E), out_f32.shape
    assert jnp.allclose(out_f32, ref, atol=1e-4, rtol=1e-4), float(
        jnp.max(jnp.abs(out_f32 - ref)))

    # Default path: bf16 MXU compute, f32 accumulation + epilogue, f32 out.
    out_def = jax.block_until_ready(
        patch_embedding(x, conv_w, conv_b, cls_token, pos_emb, patch_size=P))
    assert out_def.shape == (B, N + 1, E), out_def.shape
    assert out_def.dtype == jnp.float32
    assert jnp.allclose(out_def, ref, atol=1e-1, rtol=1e-1), float(
        jnp.max(jnp.abs(out_def - ref)))

    # bf16 output stream (downstream LayerNorm tolerates bf16 activations).
    out_bf16 = jax.block_until_ready(
        patch_embedding(x, conv_w, conv_b, cls_token, pos_emb, patch_size=P,
                        out_dtype=jnp.bfloat16))
    assert out_bf16.shape == (B, N + 1, E), out_bf16.shape
    assert out_bf16.dtype == jnp.bfloat16
    assert jnp.allclose(out_bf16.astype(jnp.float32), ref, atol=2e-1, rtol=2e-1), \
        float(jnp.max(jnp.abs(out_bf16.astype(jnp.float32) - ref)))

    print("KERNEL_OK")
</pallas_src>

<mosaic_0001>
module attributes {stable_mosaic.version = 11 : i64} {
  func.func @_patch_embed_kernel(%arg0: i32, %arg1: memref<24x64xf32, #tpu.memory_space<vmem>>, %arg2: memref<64x32xf32, #tpu.memory_space<vmem>>, %arg3: memref<24x32xf32, #tpu.memory_space<vmem>>, %arg4: memref<24x32xf32, #tpu.memory_space<vmem>>) attributes {dimension_semantics = [#tpu.dimension_semantics<parallel>], iteration_bounds = array<i64: 2>, scalar_prefetch = 0 : i64, scratch_operands = 0 : i64, tpu.core_type = #tpu.core_type<tc>, window_params = [{transform_indices = @transform_0, window_bounds = array<i64: 24, 64>}, {pipeline_mode = #tpu.pipeline_mode<synchronous>, transform_indices = @transform_1, window_bounds = array<i64: 64, 32>}, {pipeline_mode = #tpu.pipeline_mode<synchronous>, transform_indices = @transform_2, window_bounds = array<i64: 24, 32>}, {transform_indices = @transform_3, window_bounds = array<i64: 24, 32>}]} {
    %c0 = arith.constant 0 : index
    %c0_0 = arith.constant 0 : index
    %0 = vector.load %arg1[%c0, %c0_0] : memref<24x64xf32, #tpu.memory_space<vmem>>, vector<24x64xf32>
    %c0_1 = arith.constant 0 : index
    %c0_2 = arith.constant 0 : index
    %1 = vector.load %arg2[%c0_1, %c0_2] : memref<64x32xf32, #tpu.memory_space<vmem>>, vector<64x32xf32>
    %cst = arith.constant dense<0.000000e+00> : vector<24x32xf32>
    %2 = tpu.matmul %0, %1, %cst {dimension_numbers = #tpu.dot_dimension_numbers<[1], [0], [0], [1], [0, 0, 1, 1], [], []>} : vector<24x64xf32>, vector<64x32xf32>, vector<24x32xf32> -> vector<24x32xf32>
    %3 = vector.shape_cast %2 : vector<24x32xf32> to vector<1x24x32xf32>
    %c0_3 = arith.constant 0 : index
    %c0_4 = arith.constant 0 : index
    %4 = vector.load %arg3[%c0_3, %c0_4] : memref<24x32xf32, #tpu.memory_space<vmem>>, vector<24x32xf32>
    %5 = vector.shape_cast %4 : vector<24x32xf32> to vector<1x24x32xf32>
    %6 = arith.addf %3, %5 : vector<1x24x32xf32>
    %7 = vector.shape_cast %6 : vector<1x24x32xf32> to vector<24x32xf32>
    %c0_5 = arith.constant 0 : index
    %c0_6 = arith.constant 0 : index
    %8 = vector.load %arg4[%c0_5, %c0_6] : memref<24x32xf32, #tpu.memory_space<vmem>>, vector<24x32xf32>
    tpu.vector_store %arg4[%c0_5, %c0_6], %7 {strides = array<i32>} : memref<24x32xf32, #tpu.memory_space<vmem>>, vector<24x32xf32>,
    return
  }
  func.func @transform_0(%arg0: i32) -> (i32, i32) {
    %c0_i32 = arith.constant 0 : i32
    %c0_i32_0 = arith.constant 0 : i32
    return %arg0, %c0_i32 : i32, i32
  }
  func.func @transform_1(%arg0: i32) -> (i32, i32) {
    %c0_i32 = arith.constant 0 : i32
    %c0_i32_0 = arith.constant 0 : i32
    %c0_i32_1 = arith.constant 0 : i32
    return %c0_i32, %c0_i32_0 : i32, i32
  }
  func.func @transform_2(%arg0: i32) -> (i32, i32) {
    %c0_i32 = arith.constant 0 : i32
    %c0_i32_0 = arith.constant 0 : i32
    %c0_i32_1 = arith.constant 0 : i32
    return %c0_i32, %c0_i32_0 : i32, i32
  }
  func.func @transform_3(%arg0: i32) -> (i32, i32) {
    %c0_i32 = arith.constant 0 : i32
    %c0_i32_0 = arith.constant 0 : i32
    return %arg0, %c0_i32 : i32, i32
  }
}

</mosaic_0001>

<llo_original>
// kernel: patch_embedding.1
$region0: #{patch_embedding.1}
  #allocation0 [shape = 'u32[]', space=smem, size = 0x4, offset = 0x4, fixed_abs, tag = 'smem constant byte address 0x4 - core index']
  #allocation1 [shape = 'u32[144,128]{1,0:T(1,128)}', space=vmem, size = 0x12000, scoped, tag = 'internal scratch']
  %s0 = inlined_call_operand.vmem [shape: f32[48,64], index: 0, kind: input, shape index: {}]
  %s1 = inlined_call_operand.vmem [shape: f32[64,32], index: 1, kind: input, shape index: {}]
  %s2 = inlined_call_operand.vmem [shape: f32[24,32], index: 2, kind: input, shape index: {}]
  %s3 = inlined_call_operand.vmem [shape: f32[48,32], index: 3, kind: output, shape index: {}]
  %s4 = sld [smem:[#allocation0]]
  $region45: #{patch_embedding.1} parent=0
    _
  %s6 = ssub.s32 1, %s4
  %s7 = scalar_select 0, %s6, %s4
  loop: start=0, step=1, limit=4
  $region2: #{patch_embedding.1} parent=0 // loop_pre_header
    _
  $region3: #{patch_embedding.1} parent=0 // loop_header
    %s9 = sphi 0, %s13
    %p10 = scmp.ge.s32.totalorder %s9, 4
    %s19 = sphi 0, %s21
    %s22 = sphi 0, %s19
    %s23 = sphi 0, %s22
    %s39 = sphi 0, %s23
    %s43 = sphi 0, %s43
    %s45 = sphi 0, %s43
    %s46 = sphi 0, %s45
    %s60 = sphi 0, %s46
    %s64 = sphi 0, %s64
    %s66 = sphi 0, %s64
    %s67 = sphi 0, %s66
    %s81 = sphi 0, %s67
    %s87 = sphi 0, %s89
    %s90 = sphi 0, %s87
    %s91 = sphi 0, %s90
    %s107 = sphi 0, %s91
  $region4: #{patch_embedding.1} parent=0 // loop_header_branch
    %12 = sbr.rel (%p10) target = $region8
  $region5: #{patch_embedding.1} parent=0 // loop_body
    %s14 = ssub.s32 %s9, 1
    %s15 = ssub.s32 %s9, 2
    %s16 = sadd.s32 %s9, 1
    %s17 = ssub.s32 %s9, %s16
    %p18 = scmp.eq.s32.totalorder %s17, 0
    %s20 = sadd.s32 %s19, 1
    %s21 = scalar_select %p18, %s19, %s20
    %p24 = pneg %p18
    %p25 = scmp.eq.s32.totalorder %s9, 1
    %p26 = por %p24, %p25
    %p27 = scmp.ne.s32.totalorder %s19, %s22
    %p28 = scmp.eq.s32.totalorder %s9, 0
    %p29 = por %p27, %p28
    %p30 = scmp.ne.s32.totalorder %s19, %s22
    %p31 = scmp.eq.s32.totalorder %s14, 1
    %p32 = por %p30, %p31
    %p33 = scmp.ne.s32.totalorder %s22, %s23
    %p34 = scmp.eq.s32.totalorder %s14, 0
    %p35 = por %p33, %p34
    %p36 = scmp.ne.s32.totalorder %s22, %s23
    %p37 = scmp.eq.s32.totalorder %s15, 1
    %p38 = por %p36, %p37
    %p40 = scmp.ne.s32.totalorder %s23, %s39
    %p41 = scmp.eq.s32.totalorder %s15, 0
    %p42 = por %p40, %p41
    %s44 = sadd.s32 %s43, 1
    %p47 = scmp.eq.s32.totalorder %s9, 1
    %p48 = scmp.ne.s32.totalorder %s43, %s45
    %p49 = scmp.eq.s32.totalorder %s9, 0
    %p50 = por %p48, %p49
    %p51 = scmp.ne.s32.totalorder %s43, %s45
    %p52 = scmp.eq.s32.totalorder %s14, 1
    %p53 = por %p51, %p52
    %p54 = scmp.ne.s32.totalorder %s45, %s46
    %p55 = scmp.eq.s32.totalorder %s14, 0
    %p56 = por %p54, %p55
    %p57 = scmp.ne.s32.totalorder %s45, %s46
    %p58 = scmp.eq.s32.totalorder %s15, 1
    %p59 = por %p57, %p58
    %p61 = scmp.ne.s32.totalorder %s46, %s60
    %p62 = scmp.eq.s32.totalorder %s15, 0
    %p63 = por %p61, %p62
    %s65 = sadd.s32 %s64, 1
    %p68 = scmp.eq.s32.totalorder %s9, 1
    %p69 = scmp.ne.s32.totalorder %s64, %s66
    %p70 = scmp.eq.s32.totalorder %s9, 0
    %p71 = por %p69, %p70
    %p72 = scmp.ne.s32.totalorder %s64, %s66
    %p73 = scmp.eq.s32.totalorder %s14, 1
    %p74 = por %p72, %p73
    %p75 = scmp.ne.s32.totalorder %s66, %s67
    %p76 = scmp.eq.s32.totalorder %s14, 0
    %p77 = por %p75, %p76
    %p78 = scmp.ne.s32.totalorder %s66, %s67
    %p79 = scmp.eq.s32.totalorder %s15, 1
    %p80 = por %p78, %p79
    %p82 = scmp.ne.s32.totalorder %s67, %s81
    %p83 = scmp.eq.s32.totalorder %s15, 0
    %p84 = por %p82, %p83
    %s85 = ssub.s32 %s9, %s16
    %p86 = scmp.eq.s32.totalorder %s85, 0
    %s88 = sadd.s32 %s87, 1
    %s89 = scalar_select %p86, %s87, %s88
    %p92 = pneg %p86
    %p93 = scmp.eq.s32.totalorder %s9, 1
    %p94 = por %p92, %p93
    %p95 = scmp.ne.s32.totalorder %s87, %s90
    %p96 = scmp.eq.s32.totalorder %s9, 0
    %p97 = por %p95, %p96
    %p98 = scmp.ne.s32.totalorder %s87, %s90
    %p99 = scmp.eq.s32.totalorder %s14, 1
    %p100 = por %p98, %p99
    %p101 = scmp.ne.s32.totalorder %s90, %s91
    %p102 = scmp.eq.s32.totalorder %s14, 0
    %p103 = por %p101, %p102
    %p104 = scmp.ne.s32.totalorder %s90, %s91
    %p105 = scmp.eq.s32.totalorder %s15, 1
    %p106 = por %p104, %p105
    %p108 = scmp.ne.s32.totalorder %s91, %s107
    %p109 = scmp.eq.s32.totalorder %s15, 0
    %p110 = por %p108, %p109
    %p111 = scmp.le.s32.totalorder 1, %s9
    %p112 = scmp.lt.s32.totalorder %s9, 3
    %p113 = pnand %p111, %p112
    %p114 = pneg %p113
    // Predicated region
    $region9: #{patch_embedding.1} parent=5 // pred_check
      _
    $region10: #{patch_embedding.1} parent=5 // pred_check_branch
      %116 = sbr.rel (%p113) target = $region12
    $region11: #{patch_embedding.1} parent=5 // pred_region
      %s117 = ssub.s32 %s9, 1
      // Predicated region
      $region13: #{patch_embedding.1} parent=11 // pred_check
        %p118 = pneg %p56
      $region14: #{patch_embedding.1} parent=11 // pred_check_branch
        %120 = sbr.rel (%p118) target = $region16
      $region15: #{patch_embedding.1} parent=11 // pred_region
        _
      $region16: #{patch_embedding.1} parent=11 // pred_fallthru
        _
      // Predicated region
      $region17: #{patch_embedding.1} parent=11 // pred_check
        %p121 = pneg %p77
      $region18: #{patch_embedding.1} parent=11 // pred_check_branch
        %123 = sbr.rel (%p121) target = $region20
      $region19: #{patch_embedding.1} parent=11 // pred_region
        _
      $region20: #{patch_embedding.1} parent=11 // pred_fallthru
        _
    $region12: #{patch_embedding.1} parent=5 // pred_fallthru
      _
    %p124 = scmp.lt.s32.totalorder %s9, 2
    // Predicated region
    $region21: #{patch_embedding.1} parent=5 // pred_check
      %p125 = pneg %p124
    $region22: #{patch_embedding.1} parent=5 // pred_check_branch
      %127 = sbr.rel (%p125) target = $region24
    $region23: #{patch_embedding.1} parent=5 // pred_region
      // Predicated region
      $region25: #{patch_embedding.1} parent=23 // pred_check
        %p128 = pneg %p29
      $region26: #{patch_embedding.1} parent=23 // pred_check_branch
        %130 = sbr.rel (%p128) target = $region28
      $region27: #{patch_embedding.1} parent=23 // pred_region
        %s131 = smul.u32 3, %s9
        %p132 = scmp.lt.s32.totalorder %s131, 5
        %s133 = scalar_select %p132, %s131, 5
        %s134 = smul.addr %s133, 8
        %s135 = scalar_lea.vmem %s0, %s134
        %s136 = smul.u32 3, %s9
      $region28: #{patch_embedding.1} parent=23 // pred_fallthru
        _
    $region24: #{patch_embedding.1} parent=5 // pred_fallthru
      _
    %p137 = scmp.le.s32.totalorder 1, %s9
    %p138 = scmp.lt.s32.totalorder %s9, 3
    %p139 = pnand %p137, %p138
    %p140 = pneg %p139
    // Predicated region
    $region29: #{patch_embedding.1} parent=5 // pred_check
      _
    $region30: #{patch_embedding.1} parent=5 // pred_check_branch
      %142 = sbr.rel (%p139) target = $region32
    $region31: #{patch_embedding.1} parent=5 // pred_region
      %s143 = ssub.s32 %s9, 1
      %s144 = smul.u32 3, %s14
      %p145 = scmp.lt.s32.totalorder %s144, 5
      %s146 = scalar_select %p145, %s144, 5
      %s147 = smul.addr %s146, 8
      %s148 = scalar_lea.vmem %s0, %s147
      %p149 = pneg %p35
      %p150 = pneg %p32
      %p151 = pneg %p56
      %p152 = pneg %p53
      %p153 = pneg %p77
      %p154 = pneg %p74
      %p155 = pneg %p103
      %p156 = pneg %p100
      %s157 = smul.u32 3, %s14
      %p158 = scmp.lt.s32.totalorder %s157, 5
      %s159 = scalar_select %p158, %s157, 5
      %s160 = smul.addr %s159, 8
      %s161 = scalar_lea.vmem %s3, %s160
      %s162 = smul.u32 3, %s14
      %p163 = scmp.lt.s32.totalorder %s162, 5
      %s164 = scalar_select %p163, %s162, 5
      %s165 = smul.addr %s164, 8
      %s166 = scalar_lea.vmem %s0, %s165
      %s167 = smul.u32 3, %s14
      %s168 = smul.u32 3, %s14
      %p169 = scmp.lt.s32.totalorder %s168, 5
      %s170 = scalar_select %p169, %s168, 5
      %s171 = smul.addr %s170, 8
      %s172 = scalar_lea.vmem %s3, %s171
      %s173 = smul.u32 3, %s14
      %v174 = vld [vmem:[%s166] sm:$0xff]
      %v175 = vld [vmem:[%s166 + $0x8] sm:$0xff]
      %v176 = vld [vmem:[%s166 + $0x10] sm:$0xff]
      %v177 = vld [vmem:[%s1] sm:$0xff]
      %v178 = vld [vmem:[%s1 + $0x8] sm:$0xff]
      %v179 = vld [vmem:[%s1 + $0x10] sm:$0xff]
      %v180 = vld [vmem:[%s1 + $0x18] sm:$0xff]
      %v181 = vld [vmem:[%s1 + $0x20] sm:$0xff]
      %v182 = vld [vmem:[%s1 + $0x28] sm:$0xff]
      %v183 = vld [vmem:[%s1 + $0x30] sm:$0xff]
      %v184 = vld [vmem:[%s1 + $0x38] sm:$0xff]
      %vm185 = vcmask 523264
      %v187 = vsel %vm185, %v174, 0
      %v190 = vsel %vm185, %v175, 0
      %v193 = vsel %vm185, %v176, 0
      %195 = vmatprep.subr.mxu0 0.0
      %196 = vmatpush1.msra.mxu0 %v177
      %197 = vmatprep.subr.mxu0 0.0
      %198 = vmatpush1.msra.mxu0 %v178
      %199 = vmatprep.subr.mxu0 0.0
      %200 = vmatpush1.msra.mxu0 %v179
      %201 = vmatprep.subr.mxu0 0.0
      %202 = vmatpush1.msra.mxu0 %v180
      %203 = vmatprep.subr.mxu0 0.0
      %204 = vmatpush1.msra.mxu0 %v181
      %205 = vmatprep.subr.mxu0 0.0
      %206 = vmatpush1.msra.mxu0 %v182
      %207 = vmatprep.subr.mxu0 0.0
      %208 = vmatpush1.msra.mxu0 %v183
      %209 = vmatprep.subr.mxu0 0.0
      %210 = vmatpush1.msra.mxu0 %v184
      %211 = vmatprep.subr.mxu0 0.0
      %212 = vmatpush1.msra.mxu0 0.0
      %213 = vmatprep.subr.mxu0 0.0
      %214 = vmatpush1.msra.mxu0 0.0
      %215 = vmatprep.subr.mxu0 0.0
      %216 = vmatpush1.msra.mxu0 0.0
      %217 = vmatprep.subr.mxu0 0.0
      %218 = vmatpush1.msra.mxu0 0.0
      %219 = vmatprep.subr.mxu0 0.0
      %220 = vmatpush1.msra.mxu0 0.0
      %221 = vmatprep.subr.mxu0 0.0
      %222 = vmatpush1.msra.mxu0 0.0
      %223 = vmatprep.subr.mxu0 0.0
      %224 = vmatpush1.msra.mxu0 0.0
      %225 = vmatprep.subr.mxu0 0.0
      %226 = vmatpush1.msra.mxu0 0.0
      %227 = vmatprep.subr.mxu0 0.0
      %228 = vmatpush1.msra.mxu0 0.0
      %229 = vmatprep.subr.mxu0 0.0
      %230 = vmatpush1.msra.mxu0 0.0
      %231 = vmatprep.subr.mxu0 0.0
      %232 = vmatpush1.msra.mxu0 0.0
      %233 = vmatprep.subr.mxu0 0.0
      %234 = vmatpush1.msra.mxu0 0.0
      %235 = vmatprep.subr.mxu0 0.0
      %236 = vmatpush1.msra.mxu0 0.0
      %237 = vmatprep.subr.mxu0 0.0
      %238 = vmatpush1.msra.mxu0 0.0
      %239 = vmatprep.subr.mxu0 0.0
      %240 = vmatpush1.msra.mxu0 0.0
      %241 = vmatprep.subr.mxu0 0.0
      %242 = vmatpush1.msra.mxu0 0.0
      %243 = vmatprep.subr.mxu0 0.0
      %244 = vmatpush1.msra.mxu0 0.0
      %245 = vmatprep.subr.mxu0 0.0
      %246 = vmatpush1.msra.mxu0 0.0
      %247 = vmatprep.subr.mxu0 0.0
      %248 = vmatpush1.msra.mxu0 0.0
      %249 = vmatprep.subr.mxu0 0.0
      %250 = vmatpush1.msra.mxu0 0.0
      %251 = vmatprep.subr.mxu0 0.0
      %252 = vmatpush1.msra.mxu0 0.0
      %253 = vmatprep.subr.mxu0 0.0
      %254 = vmatpush1.msra.mxu0 0.0
      %255 = vmatprep.subr.mxu0 0.0
      %256 = vmatpush1.msra.mxu0 0.0
      %257 = vmatprep.subr.mxu0 0.0
      %258 = vmatpush1.msra.mxu0 0.0
      %259 = vmatprep.mubr.f32.mxu0 0.0
      %260 = vmatmul.mubr.f32.gmra.mrb[0].mxu0 %v187
      %v261 = vpop.f32.mrb[0].mxu0
      %v262 = vadd.f32 0.0, %v261
      %v263 = vpop.f32.mrb[0].mxu0
      %264 = vmatprep.mubr.f32.mxu0 0.0
      %265 = vmatmul.mubr.f32.gmra.mrb[0].mxu0 %v190
      %v266 = vpop.f32.mrb[0].mxu0
      %v267 = vadd.f32 0.0, %v266
      %v268 = vpop.f32.mrb[0].mxu0
      %269 = vmatprep.mubr.f32.mxu0 0.0
      %270 = vmatmul.mubr.f32.gmra.mrb[0].mxu0 %v193
      %v271 = vpop.f32.mrb[0].mxu0
      %v272 = vadd.f32 0.0, %v271
      %v273 = vpop.f32.mrb[0].mxu0
      %274 = vdwg.mxu0
      %v275 = vld [vmem:[%s2] sm:$0xff]
      %v276 = vld [vmem:[%s2 + $0x8] sm:$0xff]
      %v277 = vld [vmem:[%s2 + $0x10] sm:$0xff]
      %v278 = vadd.f32 %v262, %v275
      %v279 = vadd.f32 %v267, %v276
      %v280 = vadd.f32 %v272, %v277
      %vm281 = vcmask 261120
      %282 = vst.msk [vmem:[%s172] sm:$0xff] %vm281, %v278
      %283 = vst.msk [vmem:[%s172 + $0x8] sm:$0xff] %vm281, %v279
      %284 = vst.msk [vmem:[%s172 + $0x10] sm:$0xff] %vm281, %v280
      %s285 = smul.u32 3, %s14
      %p286 = scmp.lt.s32.totalorder %s285, 5
      %s287 = scalar_select %p286, %s285, 5
      %s288 = smul.addr %s287, 8
      %s289 = scalar_lea.vmem %s3, %s288
      // Predicated region
      $region33: #{patch_embedding.1} parent=31 // pred_check
        %p290 = pneg %p100
      $region34: #{patch_embedding.1} parent=31 // pred_check_branch
        %292 = sbr.rel (%p290) target = $region36
      $region35: #{patch_embedding.1} parent=31 // pred_region
        %s293 = smul.u32 3, %s14
      $region36: #{patch_embedding.1} parent=31 // pred_fallthru
        _
    $region32: #{patch_embedding.1} parent=5 // pred_fallthru
      _
    %p294 = scmp.le.s32.totalorder 2, %s9
    // Predicated region
    $region37: #{patch_embedding.1} parent=5 // pred_check
      %p295 = pneg %p294
    $region38: #{patch_embedding.1} parent=5 // pred_check_branch
      %297 = sbr.rel (%p295) target = $region40
    $region39: #{patch_embedding.1} parent=5 // pred_region
      %s298 = ssub.s32 %s9, 2
      // Predicated region
      $region41: #{patch_embedding.1} parent=39 // pred_check
        %p299 = pneg %p106
      $region42: #{patch_embedding.1} parent=39 // pred_check_branch
        %301 = sbr.rel (%p299) target = $region44
      $region43: #{patch_embedding.1} parent=39 // pred_region
        %s302 = smul.u32 3, %s15
        %p303 = scmp.lt.s32.totalorder %s302, 5
        %s304 = scalar_select %p303, %s302, 5
        %s305 = smul.addr %s304, 8
        %s306 = scalar_lea.vmem %s3, %s305
      $region44: #{patch_embedding.1} parent=39 // pred_fallthru
        _
    $region40: #{patch_embedding.1} parent=5 // pred_fallthru
      _
  $region6: #{patch_embedding.1} parent=0 // loop_footer
    %s13 = sadd.s32 1, %s9
  $region7: #{patch_embedding.1} parent=0 // loop_footer_branch
    %8 = sbr.rel target = $region3
  $region8: #{patch_embedding.1} parent=0 // loop_exit
    _

</llo_original>
